<compile_context>
chip_gen: v6e
topology: v6e:2x2x1
jax: 0.10.0
libtpu: 0.0.40
codegen_flags: <defaults>
</compile_context>

<pallas_src>
import jax
import jax.numpy as jnp
from jax.experimental import pallas as pl
from jax.experimental.pallas import tpu as pltpu


def _scale_bias_tanh_kernel(x_ref, w_ref, b_ref, o_ref):
    # x_ref : (TR, 128) activation tile in VMEM (lane-dense last dim)
    # w_ref : (1, 1) scalar conv weight in SMEM
    # b_ref : (1, 1) scalar conv bias in SMEM
    w = w_ref[0, 0]
    b = b_ref[0, 0]
    o_ref[...] = jnp.tanh(x_ref[...] * w + b)


def conv1x1_tanh(x_nchw, weight, bias, *, min_pallas_elems=1 << 18):
    """torch.nn.Conv2d(1, 1, 1, stride=1) followed by tanh.

    x_nchw : (N, 1, H, W) float32
    weight : (1, 1, 1, 1) float32
    bias   : (1,)         float32
    returns (N, 1, H, W) float32
    """
    N, Cin, H, W = x_nchw.shape
    Cout = weight.shape[0]
    assert Cin == 1 and Cout == 1, "ModelTanh uses Conv2d(1, 1, 1)"

    w_scalar = weight.reshape(())
    b_scalar = bias.reshape(())

    P = N * H * W
    # Small-input bailout: for tiny tensors (including the module's actual
    # (1,1,8,8) workload) the Pallas path is ~100% dispatch + DMA-step
    # overhead; a fused XLA elementwise op is strictly faster.
    if P < min_pallas_elems:
        return jnp.tanh(x_nchw * w_scalar + b_scalar)

    # Lane-dense 2D layout: 128 pixels per row (exactly one vreg lane width).
    # Pad P up to a multiple of 1024 (= 8 sublanes x 128 lanes) so the block
    # shape is (8,128)-aligned and the padded tail is sliced off afterwards.
    L = 128
    P_pad = ((P + 1023) // 1024) * 1024
    pad = P_pad - P
    x_flat = x_nchw.reshape(P)
    if pad:
        x_flat = jnp.pad(x_flat, (0, pad))
    R = P_pad // L  # multiple of 8
    x2d = x_flat.reshape(R, L)

    # Row tile: up to 4096 rows * 128 lanes * 4 B = 2 MiB per buffer.  With
    # double-buffered input + output that is ~8 MiB of VMEM -- comfortably
    # under the default scoped limit on v5e/v6e/v7x while being large enough
    # to amortize the ~0.35 us per-grid-step overhead (85%+ of HBM roofline).
    TR_CAP = 4096
    TR = min(R, TR_CAP)
    if TR == R and R >= 16:
        # Force >= 2 grid steps so the "parallel" axis can shard across
        # v7x's two TensorCores instead of pinning everything to one TC.
        TR = max(8, (R // 2) // 8 * 8)
    grid = (pl.cdiv(R, TR),)

    w_s = weight.reshape(1, 1)
    b_s = bias.reshape(1, 1)

    out2d = pl.pallas_call(
        _scale_bias_tanh_kernel,
        out_shape=jax.ShapeDtypeStruct((R, L), jnp.float32),
        grid=grid,
        in_specs=[
            pl.BlockSpec((TR, L), lambda i: (i, 0)),
            pl.BlockSpec(memory_space=pltpu.MemorySpace.SMEM),  # weight scalar
            pl.BlockSpec(memory_space=pltpu.MemorySpace.SMEM),  # bias scalar
        ],
        out_specs=pl.BlockSpec((TR, L), lambda i: (i, 0)),
        compiler_params=pltpu.CompilerParams(
            dimension_semantics=("parallel",)),
        cost_estimate=pl.CostEstimate(
            flops=2 * P_pad, transcendentals=P_pad,
            bytes_accessed=2 * P_pad * 4 + 8),
    )(x2d, w_s, b_s)

    out_flat = out2d.reshape(P_pad)
    if pad:
        out_flat = out_flat[:P]
    return out_flat.reshape(N, Cout, H, W)


if __name__ == "__main__":
    key = jax.random.PRNGKey(0)
    kx, kw, kb, kx2, kx3 = jax.random.split(key, 5)

    # Shapes from the PyTorch module: x = randn(1, 1, 8, 8), Conv2d(1, 1, 1).
    N, Cin, H, W = 1, 1, 8, 8
    Cout = 1

    x = jax.random.normal(kx, (N, Cin, H, W), dtype=jnp.float32)
    bound = 1.0 / (Cin * 1 * 1) ** 0.5  # PyTorch-style uniform init bound
    weight = jax.random.uniform(kw, (Cout, Cin, 1, 1), jnp.float32, -bound, bound)
    bias = jax.random.uniform(kb, (Cout,), jnp.float32, -bound, bound)

    # 1) Spec shape: takes the small-input (plain XLA) path.
    out = conv1x1_tanh(x, weight, bias)
    jax.block_until_ready(out)
    ref = jnp.tanh(x * weight[0, 0, 0, 0] + bias[0])
    assert out.shape == (N, Cout, H, W)
    assert jnp.allclose(out, ref, atol=1e-4, rtol=1e-4), "mismatch (small path)"

    # 2) Aligned shape: exercises the tiled Pallas path (no padding needed).
    x2 = jax.random.normal(kx2, (2, 1, 128, 128), dtype=jnp.float32)
    out2 = conv1x1_tanh(x2, weight, bias, min_pallas_elems=1024)
    jax.block_until_ready(out2)
    ref2 = jnp.tanh(x2 * weight[0, 0, 0, 0] + bias[0])
    assert jnp.allclose(out2, ref2, atol=1e-4, rtol=1e-4), "mismatch (aligned path)"

    # 3) Unaligned shape: exercises the pad-to-1024 Pallas path.
    x3 = jax.random.normal(kx3, (1, 1, 100, 100), dtype=jnp.float32)
    out3 = conv1x1_tanh(x3, weight, bias, min_pallas_elems=1024)
    jax.block_until_ready(out3)
    ref3 = jnp.tanh(x3 * weight[0, 0, 0, 0] + bias[0])
    assert out3.shape == x3.shape
    assert jnp.allclose(out3, ref3, atol=1e-4, rtol=1e-4), "mismatch (padded path)"

    print("KERNEL_OK")
</pallas_src>

<mosaic_0001>
module attributes {stable_mosaic.version = 11 : i64} {
  func.func @_scale_bias_tanh_kernel(%arg0: i32, %arg1: memref<128x128xf32, #tpu.memory_space<vmem>>, %arg2: memref<1x1xf32, #tpu.memory_space<smem>>, %arg3: memref<1x1xf32, #tpu.memory_space<smem>>, %arg4: memref<128x128xf32, #tpu.memory_space<vmem>>) attributes {dimension_semantics = [#tpu.dimension_semantics<parallel>], iteration_bounds = array<i64: 2>, scalar_prefetch = 0 : i64, scratch_operands = 0 : i64, tpu.core_type = #tpu.core_type<tc>, window_params = [{transform_indices = @transform_0, window_bounds = array<i64: 128, 128>}, {transform_indices = @transform_1, window_bounds = array<i64: 1, 1>}, {transform_indices = @transform_2, window_bounds = array<i64: 1, 1>}, {transform_indices = @transform_3, window_bounds = array<i64: 128, 128>}]} {
    %c0 = arith.constant 0 : index
    %c0_0 = arith.constant 0 : index
    %0 = memref.load %arg2[%c0, %c0_0] : memref<1x1xf32, #tpu.memory_space<smem>>
    %c0_1 = arith.constant 0 : index
    %c0_2 = arith.constant 0 : index
    %1 = memref.load %arg3[%c0_1, %c0_2] : memref<1x1xf32, #tpu.memory_space<smem>>
    %c0_3 = arith.constant 0 : index
    %c0_4 = arith.constant 0 : index
    %2 = vector.load %arg1[%c0_3, %c0_4] : memref<128x128xf32, #tpu.memory_space<vmem>>, vector<128x128xf32>
    %3 = vector.broadcast %0 : f32 to vector<128x128xf32>
    %4 = arith.mulf %2, %3 : vector<128x128xf32>
    %5 = vector.broadcast %1 : f32 to vector<128x128xf32>
    %6 = arith.addf %4, %5 : vector<128x128xf32>
    %7 = math.tanh %6 : vector<128x128xf32>
    %c0_5 = arith.constant 0 : index
    %c0_6 = arith.constant 0 : index
    %8 = vector.load %arg4[%c0_5, %c0_6] : memref<128x128xf32, #tpu.memory_space<vmem>>, vector<128x128xf32>
    tpu.vector_store %arg4[%c0_5, %c0_6], %7 {strides = array<i32>} : memref<128x128xf32, #tpu.memory_space<vmem>>, vector<128x128xf32>,
    return
  }
  func.func @transform_0(%arg0: i32) -> (i32, i32) {
    %c0_i32 = arith.constant 0 : i32
    %c0_i32_0 = arith.constant 0 : i32
    return %arg0, %c0_i32 : i32, i32
  }
  func.func @transform_1(%arg0: i32) -> (i32, i32) {
    %c0_i32 = arith.constant 0 : i32
    %c0_i32_0 = arith.constant 0 : i32
    %c0_i32_1 = arith.constant 0 : i32
    return %c0_i32, %c0_i32_0 : i32, i32
  }
  func.func @transform_2(%arg0: i32) -> (i32, i32) {
    %c0_i32 = arith.constant 0 : i32
    %c0_i32_0 = arith.constant 0 : i32
    %c0_i32_1 = arith.constant 0 : i32
    return %c0_i32, %c0_i32_0 : i32, i32
  }
  func.func @transform_3(%arg0: i32) -> (i32, i32) {
    %c0_i32 = arith.constant 0 : i32
    %c0_i32_0 = arith.constant 0 : i32
    return %arg0, %c0_i32 : i32, i32
  }
}

</mosaic_0001>

<llo_original>
// kernel: tpu_custom_call.1
$region0: #{tpu_custom_call.1}
  #allocation0 [shape = 'u32[]', space=smem, size = 0x4, offset = 0x4, fixed_abs, tag = 'smem constant byte address 0x4 - core index']
  #allocation1 [shape = 'u32[144,128]{1,0:T(1,128)}', space=vmem, size = 0x12000, scoped, tag = 'internal scratch']
  #allocation2 [shape = 'f32[1,1]{1,0:T(1,128)S(6)}', space=smem, size = 0x200, scoped, tag = 'scoped memory for tpu_custom_call.1']
  #allocation3 [shape = 'f32[1,1]{1,0:T(1,128)S(6)}', space=smem, size = 0x200, scoped, tag = 'scoped memory for tpu_custom_call.1']
  %s0 = inlined_call_operand.hbm [shape: f32[256,128], index: 0, kind: input, shape index: {}]
  %s1 = inlined_call_operand.<no memory space> [shape: f32[1,1], index: 1, kind: input, shape index: {}]
  %s2 = inlined_call_operand.<no memory space> [shape: f32[1,1], index: 2, kind: input, shape index: {}]
  %s3 = inlined_call_operand.hbm [shape: f32[256,128], index: 3, kind: output, shape index: {}]
  %s4 = sld [smem:[#allocation0]]
  $region49: #{tpu_custom_call.1} parent=0
    _
  %s6 = ssub.s32 1, %s4
  %s7 = scalar_select 0, %s6, %s4
  %8 = sst [smem:[#allocation2]] %s1
  %9 = sst [smem:[#allocation3]] %s2
  $region1: #{tpu_custom_call.1} parent=0
    #allocation4 [shape = 'u8[131072]{0}', space=vmem, size = 0x20000, scoped, tag = 'input window, operand 0']
    #allocation5 [shape = 's32[2]{0}', space=sflag, size = 0x8, scoped, tag = 'scoped memory for tpu_custom_call.1']
    #allocation6 [shape = 's32[2]{0}', space=sflag, size = 0x8, scoped, tag = 'scoped memory for tpu_custom_call.1']
    #allocation7 [shape = 'u8[131072]{0}', space=vmem, size = 0x20000, scoped, tag = 'output window, operand 0']
    %10 = vsyncpa [#allocation5], 0
    %s11 = scalar_lea.sflag [#allocation5], 1
    %12 = vsyncpa %s11, 0
    %13 = vsyncpa [#allocation6], 0
    %s14 = scalar_lea.sflag [#allocation6], 1
    %15 = vsyncpa %s14, 0
    loop: start=0, step=1, limit=4
    $region2: #{tpu_custom_call.1} parent=1 // loop_pre_header
      _
    $region3: #{tpu_custom_call.1} parent=1 // loop_header
      %s17 = sphi 0, %s21
      %p18 = scmp.ge.s32.totalorder %s17, 4
      %s27 = sphi 0, %s29
      %s30 = sphi 0, %s27
      %s31 = sphi 0, %s30
      %s47 = sphi 0, %s31
      %s51 = sphi 0, %s51
      %s53 = sphi 0, %s51
      %s54 = sphi 0, %s53
      %s68 = sphi 0, %s54
      %s72 = sphi 0, %s72
      %s74 = sphi 0, %s72
      %s75 = sphi 0, %s74
      %s89 = sphi 0, %s75
      %s95 = sphi 0, %s97
      %s98 = sphi 0, %s95
      %s99 = sphi 0, %s98
      %s115 = sphi 0, %s99
    $region4: #{tpu_custom_call.1} parent=1 // loop_header_branch
      %20 = sbr.rel (%p18) target = $region8
    $region5: #{tpu_custom_call.1} parent=1 // loop_body
      %s22 = ssub.s32 %s17, 1
      %s23 = ssub.s32 %s17, 2
      %s24 = sadd.s32 %s17, 1
      %s25 = ssub.s32 %s17, %s24
      %p26 = scmp.eq.s32.totalorder %s25, 0
      %s28 = sadd.s32 %s27, 1
      %s29 = scalar_select %p26, %s27, %s28
      %p32 = pneg %p26
      %p33 = scmp.eq.s32.totalorder %s17, 1
      %p34 = por %p32, %p33
      %p35 = scmp.ne.s32.totalorder %s27, %s30
      %p36 = scmp.eq.s32.totalorder %s17, 0
      %p37 = por %p35, %p36
      %p38 = scmp.ne.s32.totalorder %s27, %s30
      %p39 = scmp.eq.s32.totalorder %s22, 1
      %p40 = por %p38, %p39
      %p41 = scmp.ne.s32.totalorder %s30, %s31
      %p42 = scmp.eq.s32.totalorder %s22, 0
      %p43 = por %p41, %p42
      %p44 = scmp.ne.s32.totalorder %s30, %s31
      %p45 = scmp.eq.s32.totalorder %s23, 1
      %p46 = por %p44, %p45
      %p48 = scmp.ne.s32.totalorder %s31, %s47
      %p49 = scmp.eq.s32.totalorder %s23, 0
      %p50 = por %p48, %p49
      %s52 = sadd.s32 %s51, 1
      %p55 = scmp.eq.s32.totalorder %s17, 1
      %p56 = scmp.ne.s32.totalorder %s51, %s53
      %p57 = scmp.eq.s32.totalorder %s17, 0
      %p58 = por %p56, %p57
      %p59 = scmp.ne.s32.totalorder %s51, %s53
      %p60 = scmp.eq.s32.totalorder %s22, 1
      %p61 = por %p59, %p60
      %p62 = scmp.ne.s32.totalorder %s53, %s54
      %p63 = scmp.eq.s32.totalorder %s22, 0
      %p64 = por %p62, %p63
      %p65 = scmp.ne.s32.totalorder %s53, %s54
      %p66 = scmp.eq.s32.totalorder %s23, 1
      %p67 = por %p65, %p66
      %p69 = scmp.ne.s32.totalorder %s54, %s68
      %p70 = scmp.eq.s32.totalorder %s23, 0
      %p71 = por %p69, %p70
      %s73 = sadd.s32 %s72, 1
      %p76 = scmp.eq.s32.totalorder %s17, 1
      %p77 = scmp.ne.s32.totalorder %s72, %s74
      %p78 = scmp.eq.s32.totalorder %s17, 0
      %p79 = por %p77, %p78
      %p80 = scmp.ne.s32.totalorder %s72, %s74
      %p81 = scmp.eq.s32.totalorder %s22, 1
      %p82 = por %p80, %p81
      %p83 = scmp.ne.s32.totalorder %s74, %s75
      %p84 = scmp.eq.s32.totalorder %s22, 0
      %p85 = por %p83, %p84
      %p86 = scmp.ne.s32.totalorder %s74, %s75
      %p87 = scmp.eq.s32.totalorder %s23, 1
      %p88 = por %p86, %p87
      %p90 = scmp.ne.s32.totalorder %s75, %s89
      %p91 = scmp.eq.s32.totalorder %s23, 0
      %p92 = por %p90, %p91
      %s93 = ssub.s32 %s17, %s24
      %p94 = scmp.eq.s32.totalorder %s93, 0
      %s96 = sadd.s32 %s95, 1
      %s97 = scalar_select %p94, %s95, %s96
      %p100 = pneg %p94
      %p101 = scmp.eq.s32.totalorder %s17, 1
      %p102 = por %p100, %p101
      %p103 = scmp.ne.s32.totalorder %s95, %s98
      %p104 = scmp.eq.s32.totalorder %s17, 0
      %p105 = por %p103, %p104
      %p106 = scmp.ne.s32.totalorder %s95, %s98
      %p107 = scmp.eq.s32.totalorder %s22, 1
      %p108 = por %p106, %p107
      %p109 = scmp.ne.s32.totalorder %s98, %s99
      %p110 = scmp.eq.s32.totalorder %s22, 0
      %p111 = por %p109, %p110
      %p112 = scmp.ne.s32.totalorder %s98, %s99
      %p113 = scmp.eq.s32.totalorder %s23, 1
      %p114 = por %p112, %p113
      %p116 = scmp.ne.s32.totalorder %s99, %s115
      %p117 = scmp.eq.s32.totalorder %s23, 0
      %p118 = por %p116, %p117
      %p119 = scmp.le.s32.totalorder 1, %s17
      %p120 = scmp.lt.s32.totalorder %s17, 3
      %p121 = pnand %p119, %p120
      %p122 = pneg %p121
      // Predicated region
      $region9: #{tpu_custom_call.1} parent=5 // pred_check
        _
      $region10: #{tpu_custom_call.1} parent=5 // pred_check_branch
        %124 = sbr.rel (%p121) target = $region12
      $region11: #{tpu_custom_call.1} parent=5 // pred_region
        %s125 = ssub.s32 %s17, 1
        // Predicated region
        $region13: #{tpu_custom_call.1} parent=11 // pred_check
          %p126 = pneg %p64
        $region14: #{tpu_custom_call.1} parent=11 // pred_check_branch
          %128 = sbr.rel (%p126) target = $region16
        $region15: #{tpu_custom_call.1} parent=11 // pred_region
          _
        $region16: #{tpu_custom_call.1} parent=11 // pred_fallthru
          _
        // Predicated region
        $region17: #{tpu_custom_call.1} parent=11 // pred_check
          %p129 = pneg %p85
        $region18: #{tpu_custom_call.1} parent=11 // pred_check_branch
          %131 = sbr.rel (%p129) target = $region20
        $region19: #{tpu_custom_call.1} parent=11 // pred_region
          _
        $region20: #{tpu_custom_call.1} parent=11 // pred_fallthru
          _
      $region12: #{tpu_custom_call.1} parent=5 // pred_fallthru
        _
      %p132 = scmp.lt.s32.totalorder %s17, 2
      // Predicated region
      $region21: #{tpu_custom_call.1} parent=5 // pred_check
        %p133 = pneg %p132
      $region22: #{tpu_custom_call.1} parent=5 // pred_check_branch
        %135 = sbr.rel (%p133) target = $region24
      $region23: #{tpu_custom_call.1} parent=5 // pred_region
        // Predicated region
        $region25: #{tpu_custom_call.1} parent=23 // pred_check
          %p136 = pneg %p37
        $region26: #{tpu_custom_call.1} parent=23 // pred_check_branch
          %138 = sbr.rel (%p136) target = $region28
        $region27: #{tpu_custom_call.1} parent=23 // pred_region
          %s139 = sand.u32 %s27, 1
          %s140 = scalar_lea.sflag [#allocation5], %s139
          %s141 = sand.u32 %s27, 1
          %s142 = smul.addr %s141, 128
          %s143 = scalar_lea.vmem [#allocation4], %s142
          %s144 = smul.u32 16, %s17
          %s146 = ssub.s32 2048, 2048
          %147 = vsyncadd %s140, %s146
          %s148 = smul.addr %s144, 128
          %s149 = scalar_lea.hbm %s0, %s148
          %s150 = sshll.u32 %s143, 4
          %s151 = int_to_ptr.vmem [resolvable:$true] %s150
          %156 = dma.hbm_to_vmem [thread:$0]  %s149, 2048, %s151, %s140, 128, 128, 8
        $region28: #{tpu_custom_call.1} parent=23 // pred_fallthru
          _
      $region24: #{tpu_custom_call.1} parent=5 // pred_fallthru
        _
      %p157 = scmp.le.s32.totalorder 1, %s17
      %p158 = scmp.lt.s32.totalorder %s17, 3
      %p159 = pnand %p157, %p158
      %p160 = pneg %p159
      // Predicated region
      $region29: #{tpu_custom_call.1} parent=5 // pred_check
        _
      $region30: #{tpu_custom_call.1} parent=5 // pred_check_branch
        %162 = sbr.rel (%p159) target = $region32
      $region31: #{tpu_custom_call.1} parent=5 // pred_region
        %s163 = ssub.s32 %s17, 1
        %s164 = sand.u32 %s30, 1
        %s165 = scalar_lea.sflag [#allocation5], %s164
        %s166 = sand.u32 %s30, 1
        %s167 = smul.addr %s166, 128
        %s168 = scalar_lea.vmem [#allocation4], %s167
        // Predicated region
        $region33: #{tpu_custom_call.1} parent=31 // pred_check
          %p169 = pneg %p43
        $region34: #{tpu_custom_call.1} parent=31 // pred_check_branch
          %171 = sbr.rel (%p169) target = $region36
        $region35: #{tpu_custom_call.1} parent=31 // pred_region
          %172 = dma.done %s165, 2048
        $region36: #{tpu_custom_call.1} parent=31 // pred_fallthru
          _
        %s173 = sand.u32 %s30, 1
        %s174 = scalar_lea.sflag [#allocation5], %s173
        %s175 = sand.u32 %s30, 1
        %s176 = smul.addr %s175, 128
        %s177 = scalar_lea.vmem [#allocation4], %s176
        %p178 = pneg %p43
        %p179 = pneg %p40
        %p180 = pneg %p64
        %p181 = pneg %p61
        %p182 = pneg %p85
        %p183 = pneg %p82
        %p184 = pneg %p111
        %p185 = pneg %p108
        %s186 = sand.u32 %s98, 1
        %s187 = scalar_lea.sflag [#allocation6], %s186
        %s188 = sand.u32 %s98, 1
        %s189 = smul.addr %s188, 128
        %s190 = scalar_lea.vmem [#allocation7], %s189
        %s191 = smul.u32 16, %s22
        %s192 = smul.u32 16, %s22
        %s193 = sld [smem:[#allocation2]]
        %s194 = sld [smem:[#allocation3]]
        %v195 = vld [vmem:[%s168] sm:$0xff]
        %v196 = vld [vmem:[%s168 + $0x8] sm:$0xff]
        %v197 = vld [vmem:[%s168 + $0x10] sm:$0xff]
        %v198 = vld [vmem:[%s168 + $0x18] sm:$0xff]
        %v199 = vld [vmem:[%s168 + $0x20] sm:$0xff]
        %v200 = vld [vmem:[%s168 + $0x28] sm:$0xff]
        %v201 = vld [vmem:[%s168 + $0x30] sm:$0xff]
        %v202 = vld [vmem:[%s168 + $0x38] sm:$0xff]
        %v203 = vld [vmem:[%s168 + $0x40] sm:$0xff]
        %v204 = vld [vmem:[%s168 + $0x48] sm:$0xff]
        %v205 = vld [vmem:[%s168 + $0x50] sm:$0xff]
        %v206 = vld [vmem:[%s168 + $0x58] sm:$0xff]
        %v207 = vld [vmem:[%s168 + $0x60] sm:$0xff]
        %v208 = vld [vmem:[%s168 + $0x68] sm:$0xff]
        %v209 = vld [vmem:[%s168 + $0x70] sm:$0xff]
        %v210 = vld [vmem:[%s168 + $0x78] sm:$0xff]
        %v211 = vstv %s193
        %v212 = vmul.f32 %v195, %v211
        %v213 = vmul.f32 %v196, %v211
        %v214 = vmul.f32 %v197, %v211
        %v215 = vmul.f32 %v198, %v211
        %v216 = vmul.f32 %v199, %v211
        %v217 = vmul.f32 %v200, %v211
        %v218 = vmul.f32 %v201, %v211
        %v219 = vmul.f32 %v202, %v211
        %v220 = vmul.f32 %v203, %v211
        %v221 = vmul.f32 %v204, %v211
        %v222 = vmul.f32 %v205, %v211
        %v223 = vmul.f32 %v206, %v211
        %v224 = vmul.f32 %v207, %v211
        %v225 = vmul.f32 %v208, %v211
        %v226 = vmul.f32 %v209, %v211
        %v227 = vmul.f32 %v210, %v211
        %v228 = vstv %s194
        %v229 = vadd.f32 %v212, %v228
        %v230 = vadd.f32 %v213, %v228
        %v231 = vadd.f32 %v214, %v228
        %v232 = vadd.f32 %v215, %v228
        %v233 = vadd.f32 %v216, %v228
        %v234 = vadd.f32 %v217, %v228
        %v235 = vadd.f32 %v218, %v228
        %v236 = vadd.f32 %v219, %v228
        %v237 = vadd.f32 %v220, %v228
        %v238 = vadd.f32 %v221, %v228
        %v239 = vadd.f32 %v222, %v228
        %v240 = vadd.f32 %v223, %v228
        %v241 = vadd.f32 %v224, %v228
        %v242 = vadd.f32 %v225, %v228
        %v243 = vadd.f32 %v226, %v228
        %v244 = vadd.f32 %v227, %v228
        %v245 = vtanh.pop %v229
        %v246 = vtanh.pop %v230
        %v247 = vtanh.pop %v231
        %v248 = vtanh.pop %v232
        %v249 = vtanh.pop %v233
        %v250 = vtanh.pop %v234
        %v251 = vtanh.pop %v235
        %v252 = vtanh.pop %v236
        %v253 = vtanh.pop %v237
        %v254 = vtanh.pop %v238
        %v255 = vtanh.pop %v239
        %v256 = vtanh.pop %v240
        %v257 = vtanh.pop %v241
        %v258 = vtanh.pop %v242
        %v259 = vtanh.pop %v243
        %v260 = vtanh.pop %v244
        %261 = vst [vmem:[%s190] sm:$0xff] %v245
        %262 = vst [vmem:[%s190 + $0x8] sm:$0xff] %v246
        %263 = vst [vmem:[%s190 + $0x10] sm:$0xff] %v247
        %264 = vst [vmem:[%s190 + $0x18] sm:$0xff] %v248
        %265 = vst [vmem:[%s190 + $0x20] sm:$0xff] %v249
        %266 = vst [vmem:[%s190 + $0x28] sm:$0xff] %v250
        %267 = vst [vmem:[%s190 + $0x30] sm:$0xff] %v251
        %268 = vst [vmem:[%s190 + $0x38] sm:$0xff] %v252
        %269 = vst [vmem:[%s190 + $0x40] sm:$0xff] %v253
        %270 = vst [vmem:[%s190 + $0x48] sm:$0xff] %v254
        %271 = vst [vmem:[%s190 + $0x50] sm:$0xff] %v255
        %272 = vst [vmem:[%s190 + $0x58] sm:$0xff] %v256
        %273 = vst [vmem:[%s190 + $0x60] sm:$0xff] %v257
        %274 = vst [vmem:[%s190 + $0x68] sm:$0xff] %v258
        %275 = vst [vmem:[%s190 + $0x70] sm:$0xff] %v259
        %276 = vst [vmem:[%s190 + $0x78] sm:$0xff] %v260
        %s277 = sand.u32 %s98, 1
        %s278 = scalar_lea.sflag [#allocation6], %s277
        %s279 = sand.u32 %s98, 1
        %s280 = smul.addr %s279, 128
        %s281 = scalar_lea.vmem [#allocation7], %s280
        // Predicated region
        $region37: #{tpu_custom_call.1} parent=31 // pred_check
          %p282 = pneg %p108
        $region38: #{tpu_custom_call.1} parent=31 // pred_check_branch
          %284 = sbr.rel (%p282) target = $region40
        $region39: #{tpu_custom_call.1} parent=31 // pred_region
          %s285 = smul.u32 16, %s22
          %s287 = ssub.s32 2048, 2048
          %288 = vsyncadd %s278, %s287
          %s289 = smul.addr %s285, 128
          %s290 = scalar_lea.hbm %s3, %s289
          %s291 = sshll.u32 %s281, 4
          %s292 = int_to_ptr.vmem [resolvable:$true] %s291
          %297 = dma.vmem_to_hbm [thread:$0]  %s292, 2048, %s290, %s278, 128, 128, 8
        $region40: #{tpu_custom_call.1} parent=31 // pred_fallthru
          _
      $region32: #{tpu_custom_call.1} parent=5 // pred_fallthru
        _
      %p298 = scmp.le.s32.totalorder 2, %s17
      // Predicated region
      $region41: #{tpu_custom_call.1} parent=5 // pred_check
        %p299 = pneg %p298
      $region42: #{tpu_custom_call.1} parent=5 // pred_check_branch
        %301 = sbr.rel (%p299) target = $region44
      $region43: #{tpu_custom_call.1} parent=5 // pred_region
        %s302 = ssub.s32 %s17, 2
        // Predicated region
        $region45: #{tpu_custom_call.1} parent=43 // pred_check
          %p303 = pneg %p114
        $region46: #{tpu_custom_call.1} parent=43 // pred_check_branch
          %305 = sbr.rel (%p303) target = $region48
        $region47: #{tpu_custom_call.1} parent=43 // pred_region
          %s306 = sand.u32 %s99, 1
          %s307 = scalar_lea.sflag [#allocation6], %s306
          %s308 = sand.u32 %s99, 1
          %s309 = smul.addr %s308, 128
          %s310 = scalar_lea.vmem [#allocation7], %s309
          %311 = dma.done %s307, 2048
        $region48: #{tpu_custom_call.1} parent=43 // pred_fallthru
          _
      $region44: #{tpu_custom_call.1} parent=5 // pred_fallthru
        _
    $region6: #{tpu_custom_call.1} parent=1 // loop_footer
      %s21 = sadd.s32 1, %s17
    $region7: #{tpu_custom_call.1} parent=1 // loop_footer_branch
      %16 = sbr.rel target = $region3
    $region8: #{tpu_custom_call.1} parent=1 // loop_exit
      _
    %312 = vsyncpa [#allocation5], 1
    %s313 = scalar_lea.sflag [#allocation5], 1
    %314 = vsyncpa %s313, 1
    %315 = vsyncpa [#allocation6], 1
    %s316 = scalar_lea.sflag [#allocation6], 1
    %317 = vsyncpa %s316, 1

</llo_original>
